<compile_context>
chip_gen: v6e
topology: v6e:2x2x1
jax: 0.10.0
libtpu: 0.0.40
codegen_flags: <defaults>
</compile_context>

<pallas_src>
import math
from functools import partial

import jax
import jax.numpy as jnp
from jax.experimental import pallas as pl
from jax.experimental.pallas import tpu as pltpu


def _glimpse_kernel(n_glimpses, use_mxu, q_ref, ref_ref, wfold_ref, out_ref):
    ref = ref_ref[...]          # [TB, S, H], f32
    wfold = wfold_ref[...]      # [H, H], f32   (1/sqrt(H) already folded in)
    cq = q_ref[...]             # [TB, H], f32

    if use_mxu:
        ref_mx = ref.astype(jnp.bfloat16)

    # Static Python loop -> fully unrolled, full scheduler visibility.
    for _ in range(n_glimpses):
        # Folded query projection: q_eff = cq @ (Wq^T Wk / sqrt(H))   [TB, H]
        q_eff = jnp.dot(cq, wfold, preferred_element_type=jnp.float32)

        if use_mxu:
            # MXU path: bf16 operands, f32 accumulation.
            scores = jnp.einsum('bh,bsh->bs', q_eff.astype(jnp.bfloat16), ref_mx,
                                preferred_element_type=jnp.float32)
        else:
            # VPU/XLU path: broadcast-mul + lane reduce (per-batch matvecs waste
            # the MXU and add FIFO latency on the serial cq chain).
            scores = jnp.sum(q_eff[:, None, :] * ref, axis=-1)          # [TB, S]

        # Numerically-stable softmax over the sequence axis — f32 throughout.
        m = jnp.max(scores, axis=-1, keepdims=True)
        e = jnp.exp(scores - m)
        w = e / jnp.sum(e, axis=-1, keepdims=True)                      # [TB, S]

        if use_mxu:
            cq = jnp.einsum('bs,bsh->bh', w.astype(jnp.bfloat16), ref_mx,
                            preferred_element_type=jnp.float32)
        else:
            cq = jnp.sum(w[:, :, None] * ref, axis=1)                   # [TB, H]

    out_ref[...] = cq


def glimpse_attention_forward(params, query, ref, n_glimpses=1, batch_tile=None):
    """query: [B, H], ref: [B, S, H] -> glimpsed representation [B, H]."""
    # The algebraic projection fold assumes bias-free q_proj / k_proj
    # (true for the PyTorch module: nn.Linear(..., bias=False)).
    assert params.get('q_b') is None and params.get('k_b') is None, \
        "projection fold requires bias-free q_proj/k_proj"

    query = jnp.asarray(query, jnp.float32)
    ref = jnp.asarray(ref, jnp.float32)
    B, S, H = ref.shape

    # One-time folded weight (data independent; hoisted out of the kernel/grid):
    #   scores[b,s] = (cq @ Wq^T) . (ref[b,s] @ Wk^T) / sqrt(H)
    #               = (cq @ (Wq^T Wk / sqrt(H))) . ref[b,s]
    w_fold = (jnp.dot(params['q_w'].T.astype(jnp.float32),
                      params['k_w'].astype(jnp.float32),
                      precision='highest') * (1.0 / math.sqrt(H)))

    # Batch tiling: full batch at toy sizes, multiples of 8 sublanes otherwise.
    if batch_tile is None:
        batch_tile = B if B <= 8 else 8
    TB = min(batch_tile, B)
    grid = (pl.cdiv(B, TB),)

    # Use the MXU only when a tile actually fills it; otherwise VPU path.
    use_mxu = (TB * S >= 1024) and (H >= 128)

    out = pl.pallas_call(
        partial(_glimpse_kernel, n_glimpses, use_mxu),
        out_shape=jax.ShapeDtypeStruct((B, H), jnp.float32),
        grid=grid,
        in_specs=[
            pl.BlockSpec((TB, H), lambda i: (i, 0)),        # current_query tile
            pl.BlockSpec((TB, S, H), lambda i: (i, 0, 0)),  # ref tile
            pl.BlockSpec((H, H), lambda i: (0, 0)),         # folded weight (resident)
        ],
        out_specs=pl.BlockSpec((TB, H), lambda i: (i, 0)),
        compiler_params=pltpu.CompilerParams(
            dimension_semantics=("parallel",)),             # megacore on v7x
    )(query, ref, w_fold)
    return out


def _glimpse_reference(params, query, ref, n_glimpses):
    """Plain-JAX reference mirroring the PyTorch module exactly."""
    H = ref.shape[-1]
    cq = query
    for _ in range(n_glimpses):
        q = cq @ params['q_w'].T
        k = jnp.einsum('bsh,ih->bsi', ref, params['k_w'])
        scores = jnp.einsum('bh,bsh->bs', q, k) / math.sqrt(H)
        w = jax.nn.softmax(scores, axis=-1)
        cq = jnp.einsum('bs,bsh->bh', w, ref)
    return cq


if __name__ == "__main__":
    B, S, H = 2, 8, 32
    n_glimpses = 2

    key = jax.random.PRNGKey(0)
    kq, kr, kwq, kwk = jax.random.split(key, 4)
    scale = 1.0 / math.sqrt(H)
    params = {
        'q_w': jax.random.normal(kwq, (H, H), jnp.float32) * scale,   # q_proj.weight
        'k_w': jax.random.normal(kwk, (H, H), jnp.float32) * scale,   # k_proj.weight
        # v_proj is unused on the return_attention path -> not materialized.
    }
    query = jax.random.normal(kq, (B, H), jnp.float32)
    ref = jax.random.normal(kr, (B, S, H), jnp.float32)

    # n_glimpses = 2 (exercises the unrolled loop)
    out = glimpse_attention_forward(params, query, ref, n_glimpses)
    jax.block_until_ready(out)
    assert out.shape == (B, H)
    assert bool(jnp.all(jnp.isfinite(out)))

    with jax.default_matmul_precision("highest"):
        ref_out = _glimpse_reference(params, query, ref, n_glimpses)
    assert jnp.allclose(out, ref_out, atol=1e-3, rtol=1e-3), \
        f"max abs err = {float(jnp.max(jnp.abs(out - ref_out)))}"

    # n_glimpses = 1 (module default)
    out1 = glimpse_attention_forward(params, query, ref, 1)
    jax.block_until_ready(out1)
    with jax.default_matmul_precision("highest"):
        ref_out1 = _glimpse_reference(params, query, ref, 1)
    assert jnp.allclose(out1, ref_out1, atol=1e-3, rtol=1e-3)

    print("KERNEL_OK")
</pallas_src>

<mosaic_0001>
module attributes {stable_mosaic.version = 11 : i64} {
  func.func @_glimpse_kernel(%arg0: i32, %arg1: memref<2x32xf32, #tpu.memory_space<vmem>>, %arg2: memref<2x8x32xf32, #tpu.memory_space<vmem>>, %arg3: memref<32x32xf32, #tpu.memory_space<vmem>>, %arg4: memref<2x32xf32, #tpu.memory_space<vmem>>) attributes {dimension_semantics = [#tpu.dimension_semantics<parallel>], iteration_bounds = array<i64: 1>, scalar_prefetch = 0 : i64, scratch_operands = 0 : i64, tpu.core_type = #tpu.core_type<tc>, window_params = [{transform_indices = @transform_0, window_bounds = array<i64: 2, 32>}, {transform_indices = @transform_1, window_bounds = array<i64: 2, 8, 32>}, {pipeline_mode = #tpu.pipeline_mode<synchronous>, transform_indices = @transform_2, window_bounds = array<i64: 32, 32>}, {transform_indices = @transform_3, window_bounds = array<i64: 2, 32>}]} {
    %c0 = arith.constant 0 : index
    %c0_0 = arith.constant 0 : index
    %c0_1 = arith.constant 0 : index
    %0 = vector.load %arg2[%c0, %c0_0, %c0_1] : memref<2x8x32xf32, #tpu.memory_space<vmem>>, vector<2x8x32xf32>
    %c0_2 = arith.constant 0 : index
    %c0_3 = arith.constant 0 : index
    %1 = vector.load %arg3[%c0_2, %c0_3] : memref<32x32xf32, #tpu.memory_space<vmem>>, vector<32x32xf32>
    %c0_4 = arith.constant 0 : index
    %c0_5 = arith.constant 0 : index
    %2 = vector.load %arg1[%c0_4, %c0_5] : memref<2x32xf32, #tpu.memory_space<vmem>>, vector<2x32xf32>
    %cst = arith.constant dense<0.000000e+00> : vector<2x32xf32>
    %3 = tpu.matmul %2, %1, %cst {dimension_numbers = #tpu.dot_dimension_numbers<[1], [0], [0], [1], [0, 0, 1, 1], [], []>} : vector<2x32xf32>, vector<32x32xf32>, vector<2x32xf32> -> vector<2x32xf32>
    %4 = vector.shape_cast %3 : vector<2x32xf32> to vector<2x1x32xf32>
    %5 = vector.broadcast %4 : vector<2x1x32xf32> to vector<2x8x32xf32>
    %6 = arith.mulf %5, %0 : vector<2x8x32xf32>
    %cst_6 = arith.constant dense<0.000000e+00> : vector<2x8xf32>
    %7 = vector.multi_reduction <add>, %6, %cst_6 [2] : vector<2x8x32xf32> to vector<2x8xf32>
    %cst_7 = arith.constant dense<0xFF800000> : vector<2xf32>
    %8 = vector.multi_reduction <maximumf>, %7, %cst_7 [1] : vector<2x8xf32> to vector<2xf32>
    %9 = vector.shape_cast %8 : vector<2xf32> to vector<2x1xf32>
    %10 = vector.broadcast %9 : vector<2x1xf32> to vector<2x8xf32>
    %11 = arith.subf %7, %10 : vector<2x8xf32>
    %12 = math.exp %11 : vector<2x8xf32>
    %cst_8 = arith.constant dense<0.000000e+00> : vector<2xf32>
    %13 = vector.multi_reduction <add>, %12, %cst_8 [1] : vector<2x8xf32> to vector<2xf32>
    %14 = vector.shape_cast %13 : vector<2xf32> to vector<2x1xf32>
    %15 = vector.broadcast %14 : vector<2x1xf32> to vector<2x8xf32>
    %16 = arith.divf %12, %15 : vector<2x8xf32>
    %17 = vector.shape_cast %16 : vector<2x8xf32> to vector<2x8x1xf32>
    %18 = vector.broadcast %17 : vector<2x8x1xf32> to vector<2x8x32xf32>
    %19 = arith.mulf %18, %0 : vector<2x8x32xf32>
    %cst_9 = arith.constant dense<0.000000e+00> : vector<2x32xf32>
    %20 = vector.multi_reduction <add>, %19, %cst_9 [1] : vector<2x8x32xf32> to vector<2x32xf32>
    %cst_10 = arith.constant dense<0.000000e+00> : vector<2x32xf32>
    %21 = tpu.matmul %20, %1, %cst_10 {dimension_numbers = #tpu.dot_dimension_numbers<[1], [0], [0], [1], [0, 0, 1, 1], [], []>} : vector<2x32xf32>, vector<32x32xf32>, vector<2x32xf32> -> vector<2x32xf32>
    %22 = vector.shape_cast %21 : vector<2x32xf32> to vector<2x1x32xf32>
    %23 = vector.broadcast %22 : vector<2x1x32xf32> to vector<2x8x32xf32>
    %24 = arith.mulf %23, %0 : vector<2x8x32xf32>
    %cst_11 = arith.constant dense<0.000000e+00> : vector<2x8xf32>
    %25 = vector.multi_reduction <add>, %24, %cst_11 [2] : vector<2x8x32xf32> to vector<2x8xf32>
    %cst_12 = arith.constant dense<0xFF800000> : vector<2xf32>
    %26 = vector.multi_reduction <maximumf>, %25, %cst_12 [1] : vector<2x8xf32> to vector<2xf32>
    %27 = vector.shape_cast %26 : vector<2xf32> to vector<2x1xf32>
    %28 = vector.broadcast %27 : vector<2x1xf32> to vector<2x8xf32>
    %29 = arith.subf %25, %28 : vector<2x8xf32>
    %30 = math.exp %29 : vector<2x8xf32>
    %cst_13 = arith.constant dense<0.000000e+00> : vector<2xf32>
    %31 = vector.multi_reduction <add>, %30, %cst_13 [1] : vector<2x8xf32> to vector<2xf32>
    %32 = vector.shape_cast %31 : vector<2xf32> to vector<2x1xf32>
    %33 = vector.broadcast %32 : vector<2x1xf32> to vector<2x8xf32>
    %34 = arith.divf %30, %33 : vector<2x8xf32>
    %35 = vector.shape_cast %34 : vector<2x8xf32> to vector<2x8x1xf32>
    %36 = vector.broadcast %35 : vector<2x8x1xf32> to vector<2x8x32xf32>
    %37 = arith.mulf %36, %0 : vector<2x8x32xf32>
    %cst_14 = arith.constant dense<0.000000e+00> : vector<2x32xf32>
    %38 = vector.multi_reduction <add>, %37, %cst_14 [1] : vector<2x8x32xf32> to vector<2x32xf32>
    %c0_15 = arith.constant 0 : index
    %c0_16 = arith.constant 0 : index
    %39 = vector.load %arg4[%c0_15, %c0_16] : memref<2x32xf32, #tpu.memory_space<vmem>>, vector<2x32xf32>
    tpu.vector_store %arg4[%c0_15, %c0_16], %38 {strides = array<i32>} : memref<2x32xf32, #tpu.memory_space<vmem>>, vector<2x32xf32>,
    return
  }
  func.func @transform_0(%arg0: i32) -> (i32, i32) {
    %c0_i32 = arith.constant 0 : i32
    %c0_i32_0 = arith.constant 0 : i32
    return %arg0, %c0_i32 : i32, i32
  }
  func.func @transform_1(%arg0: i32) -> (i32, i32, i32) {
    %c0_i32 = arith.constant 0 : i32
    %c0_i32_0 = arith.constant 0 : i32
    %c0_i32_1 = arith.constant 0 : i32
    return %arg0, %c0_i32, %c0_i32_0 : i32, i32, i32
  }
  func.func @transform_2(%arg0: i32) -> (i32, i32) {
    %c0_i32 = arith.constant 0 : i32
    %c0_i32_0 = arith.constant 0 : i32
    %c0_i32_1 = arith.constant 0 : i32
    return %c0_i32, %c0_i32_0 : i32, i32
  }
  func.func @transform_3(%arg0: i32) -> (i32, i32) {
    %c0_i32 = arith.constant 0 : i32
    %c0_i32_0 = arith.constant 0 : i32
    return %arg0, %c0_i32 : i32, i32
  }
}

</mosaic_0001>

<llo_original>
// kernel: tpu_custom_call.1
$region0: #{tpu_custom_call.1}
  #allocation0 [shape = 'u32[]', space=smem, size = 0x4, offset = 0x4, fixed_abs, tag = 'smem constant byte address 0x4 - core index']
  #allocation1 [shape = 'u32[144,128]{1,0:T(1,128)}', space=vmem, size = 0x12000, scoped, tag = 'internal scratch']
  %s0 = inlined_call_operand.hbm [shape: f32[2,32], index: 0, kind: input, shape index: {}]
  %s1 = inlined_call_operand.hbm [shape: f32[2,8,32], index: 1, kind: input, shape index: {}]
  %s2 = inlined_call_operand.hbm [shape: f32[32,32], index: 2, kind: input, shape index: {}]
  %s3 = inlined_call_operand.hbm [shape: f32[2,32], index: 3, kind: output, shape index: {}]
  %s4 = sld [smem:[#allocation0]]
  $region34: #{tpu_custom_call.1} parent=0
    _
  %s6 = ssub.s32 1, %s4
  %s7 = scalar_select 0, %s6, %s4
  $region1: #{tpu_custom_call.1} parent=0
    #allocation2 [shape = 'u8[1024]{0}', space=vmem, size = 0x400, scoped, tag = 'input window, operand 0, single buffered']
    #allocation3 [shape = 's32[1]{0}', space=sflag, size = 0x4, scoped, tag = 'scoped memory for tpu_custom_call.1']
    #allocation4 [shape = 's32[1]{0}', space=sflag, size = 0x4, scoped, tag = 'scoped memory for tpu_custom_call.1']
    #allocation5 [shape = 'u8[8192]{0}', space=vmem, size = 0x2000, scoped, tag = 'input window, operand 1, single buffered']
    #allocation6 [shape = 's32[1]{0}', space=sflag, size = 0x4, scoped, tag = 'scoped memory for tpu_custom_call.1']
    #allocation7 [shape = 'u8[16384]{0}', space=vmem, size = 0x4000, scoped, tag = 'input window, operand 2, single buffered']
    #allocation8 [shape = 'u8[1024]{0}', space=vmem, size = 0x400, scoped, tag = 'output window, operand 0, single buffered']
    %8 = vsyncpa [#allocation3], 0
    %9 = vsyncpa [#allocation6], 0
    %10 = vsyncpa [#allocation4], 0
    // Predicated region
    $region2: #{tpu_custom_call.1} parent=1 // pred_check
      _
    $region3: #{tpu_custom_call.1} parent=1 // pred_check_branch
      %12 = sbr.rel (0) target = $region5
    $region4: #{tpu_custom_call.1} parent=1 // pred_region
      %s14 = ssub.s32 32, 32
      %15 = vsyncadd [#allocation3], %s14
      %s17 = sshll.u32 [#allocation2], 4
      %s18 = int_to_ptr.vmem [resolvable:$true] %s17
      %20 = dma.hbm_to_vmem [thread:$0]  %s0, 32, %s18, [#allocation3]
    $region5: #{tpu_custom_call.1} parent=1 // pred_fallthru
      _
    // Predicated region
    $region6: #{tpu_custom_call.1} parent=1 // pred_check
      _
    $region7: #{tpu_custom_call.1} parent=1 // pred_check_branch
      %22 = sbr.rel (0) target = $region9
    $region8: #{tpu_custom_call.1} parent=1 // pred_region
      %s24 = ssub.s32 256, 256
      %25 = vsyncadd [#allocation6], %s24
      %s26 = sshll.u32 [#allocation5], 4
      %s27 = int_to_ptr.vmem [resolvable:$true] %s26
      %32 = dma.hbm_to_vmem [thread:$0]  %s1, 256, %s27, [#allocation6], 128, 128, 8
    $region9: #{tpu_custom_call.1} parent=1 // pred_fallthru
      _
    // Predicated region
    $region10: #{tpu_custom_call.1} parent=1 // pred_check
      _
    $region11: #{tpu_custom_call.1} parent=1 // pred_check_branch
      %34 = sbr.rel (0) target = $region13
    $region12: #{tpu_custom_call.1} parent=1 // pred_region
      %s36 = ssub.s32 512, 512
      %37 = vsyncadd [#allocation6], %s36
      %s38 = sshll.u32 [#allocation7], 4
      %s39 = int_to_ptr.vmem [resolvable:$true] %s38
      %44 = dma.hbm_to_vmem [thread:$0]  %s2, 512, %s39, [#allocation6], 128, 128, 8
    $region13: #{tpu_custom_call.1} parent=1 // pred_fallthru
      _
    // Predicated region
    $region14: #{tpu_custom_call.1} parent=1 // pred_check
      _
    $region15: #{tpu_custom_call.1} parent=1 // pred_check_branch
      %46 = sbr.rel (0) target = $region17
    $region16: #{tpu_custom_call.1} parent=1 // pred_region
      %47 = dma.done [#allocation3], 32
    $region17: #{tpu_custom_call.1} parent=1 // pred_fallthru
      _
    // Predicated region
    $region18: #{tpu_custom_call.1} parent=1 // pred_check
      _
    $region19: #{tpu_custom_call.1} parent=1 // pred_check_branch
      %49 = sbr.rel (0) target = $region21
    $region20: #{tpu_custom_call.1} parent=1 // pred_region
      %50 = dma.done [#allocation6], 256
    $region21: #{tpu_custom_call.1} parent=1 // pred_fallthru
      _
    // Predicated region
    $region22: #{tpu_custom_call.1} parent=1 // pred_check
      _
    $region23: #{tpu_custom_call.1} parent=1 // pred_check_branch
      %52 = sbr.rel (0) target = $region25
    $region24: #{tpu_custom_call.1} parent=1 // pred_region
      %53 = dma.done [#allocation6], 512
    $region25: #{tpu_custom_call.1} parent=1 // pred_fallthru
      _
    %v54 = vld [vmem:[#allocation5] sm:$0xff]
    %v55 = vld [vmem:[#allocation5 + $0x8] sm:$0xff]
    %v56 = vld [vmem:[#allocation7] sm:$0xff]
    %v57 = vld [vmem:[#allocation7 + $0x8] sm:$0xff]
    %v58 = vld [vmem:[#allocation7 + $0x10] sm:$0xff]
    %v59 = vld [vmem:[#allocation7 + $0x18] sm:$0xff]
    %v60 = vld [vmem:[#allocation2] sm:$0x3]
    %vm61 = vcmask 261120
    %v63 = vsel %vm61, %v60, 0
    %65 = vmatprep.subr.mxu0 0.0
    %66 = vmatpush1.msra.mxu0 0.0
    %67 = vmatprep.subr.mxu0 0.0
    %68 = vmatpush1.msra.mxu0 0.0
    %69 = vmatprep.subr.mxu0 0.0
    %70 = vmatpush1.msra.mxu0 0.0
    %71 = vmatprep.subr.mxu0 0.0
    %72 = vmatpush1.msra.mxu0 0.0
    %73 = vmatprep.subr.mxu0 0.0
    %74 = vmatpush1.msra.mxu0 0.0
    %75 = vmatprep.subr.mxu0 0.0
    %76 = vmatpush1.msra.mxu0 0.0
    %77 = vmatprep.subr.mxu0 0.0
    %78 = vmatpush1.msra.mxu0 0.0
    %79 = vmatprep.subr.mxu0 0.0
    %80 = vmatpush1.msra.mxu0 0.0
    %81 = vmatprep.subr.mxu0 0.0
    %82 = vmatpush1.msra.mxu0 0.0
    %83 = vmatprep.subr.mxu0 0.0
    %84 = vmatpush1.msra.mxu0 0.0
    %85 = vmatprep.subr.mxu0 0.0
    %86 = vmatpush1.msra.mxu0 0.0
    %87 = vmatprep.subr.mxu0 0.0
    %88 = vmatpush1.msra.mxu0 0.0
    %89 = vmatprep.subr.mxu0 0.0
    %90 = vmatpush1.msra.mxu0 %v59
    %91 = vmatprep.subr.mxu0 0.0
    %92 = vmatpush1.msra.mxu0 %v58
    %93 = vmatprep.subr.mxu0 0.0
    %94 = vmatpush1.msra.mxu0 %v57
    %95 = vmatprep.subr.mxu0 0.0
    %96 = vmatpush1.msra.mxu0 %v56
    %97 = vmatprep.subr.mxu0 0.0
    %98 = vmatpush2.msra.mxu0 0.0
    %99 = vmatprep.subr.mxu0 0.0
    %100 = vmatpush2.msra.mxu0 0.0
    %101 = vmatprep.subr.mxu0 0.0
    %102 = vmatpush2.msra.mxu0 0.0
    %103 = vmatprep.subr.mxu0 0.0
    %104 = vmatpush2.msra.mxu0 0.0
    %105 = vmatprep.subr.mxu0 0.0
    %106 = vmatpush2.msra.mxu0 0.0
    %107 = vmatprep.subr.mxu0 0.0
    %108 = vmatpush2.msra.mxu0 0.0
    %109 = vmatprep.subr.mxu0 0.0
    %110 = vmatpush2.msra.mxu0 0.0
    %111 = vmatprep.subr.mxu0 0.0
    %112 = vmatpush2.msra.mxu0 0.0
    %113 = vmatprep.subr.mxu0 0.0
    %114 = vmatpush2.msra.mxu0 0.0
    %115 = vmatprep.subr.mxu0 0.0
    %116 = vmatpush2.msra.mxu0 0.0
    %117 = vmatprep.subr.mxu0 0.0
    %118 = vmatpush2.msra.mxu0 0.0
    %119 = vmatprep.subr.mxu0 0.0
    %120 = vmatpush2.msra.mxu0 0.0
    %121 = vmatprep.subr.mxu0 0.0
    %122 = vmatpush2.msra.mxu0 0.0
    %123 = vmatprep.subr.mxu0 0.0
    %124 = vmatpush2.msra.mxu0 0.0
    %125 = vmatprep.subr.mxu0 0.0
    %126 = vmatpush2.msra.mxu0 0.0
    %127 = vmatprep.subr.mxu0 0.0
    %128 = vmatpush2.msra.mxu0 0.0
    %129 = vmatprep.mubr.f32.mxu0 0.0
    %130 = vmatmul.mubr.f32.gmra.mxu0 %v63
    %v131 = vpop.f32.mrf.mxu0
    %v132 = vadd.f32 0.0, %v131
    %v133 = vpop.f32.mrf.mxu0
    %134 = vdwg.mxu0
    %v137 = vunpack.c.l.s4 1966171168
    %v138 = vunpack.c.0.s8 %v137
    %v139 = vlaneseq
    %v140 = vshrl.u32 %v139, 7
    %v141 = vsub.s32 %v138, %v140
    %v142 = vrot.slane %v132, %v141
    %v143 = vcombine.high %v142, %v142
    %v145 = vunpack.c.l.s4 1966171168
    %v146 = vunpack.c.0.s8 %v145
    %v147 = vlaneseq
    %v148 = vshrl.u32 %v147, 7
    %v149 = vsub.s32 %v146, %v148
    %v150 = vrot.slane %v142, %v149
    %v152 = vunpack.c.l.s4 1966171168
    %v153 = vunpack.c.0.s8 %v152
    %v154 = vlaneseq
    %v155 = vshrl.u32 %v154, 7
    %v156 = vsub.s32 %v153, %v155
    %v157 = vrot.slane %v143, %v156
    %v158 = vlaneseq
    %v159 = vshrl.u32 %v158, 7
    %v160 = vsub.s32 0, %v159
    %v161 = vrot.slane %v150, %v160
    %v162 = vlaneseq
    %v163 = vshrl.u32 %v162, 7
    %v164 = vsub.s32 0, %v163
    %v165 = vrot.slane %v157, %v164
    %v168 = vmul.f32 %v161, %v54
    %v169 = vmul.f32 %v165, %v55
    %v170 = vsel %vm61, %v168, 0.0
    %171 = vadd.xlane.f32.xlu0 %v170
    %v172 = vpop.xlane.xlu0 %171
    %v173 = vsel %vm61, %v169, 0.0
    %174 = vadd.xlane.f32.xlu0 %v173
    %v175 = vpop.xlane.xlu0 %174
    %v178 = vlaneseq
    %v179 = vand.u32 %v178, 127
    %v180 = vlaneseq
    %v181 = vshrl.u32 %v180, 7
    %v182 = vsub.s32 %v179, %v181
    %v183 = vrot.slane %v172, %v182
    %v184 = vlaneseq
    %v185 = vshrl.u32 %v184, 7
    %v186 = vsub.s32 %v179, %v185
    %v187 = vrot.slane %v175, %v186
    %vm188 = vcmask 1041409
    %v189 = vsel %vm188, %v187, %v183
    %vm191 = vcmask 58368
    %v192 = vsel %vm191, %v189, -inf
    %193 = vmax.xlane.f32.xlu0 %v192
    %v194 = vpop.xlane.xlu0 %193
    %v196 = vlaneseq
    %v197 = vshrl.u32 %v196, 7
    %v198 = vsub.s32 0, %v197
    %v199 = vrot.slane %v194, %v198
    %v200 = vlaneseq
    %v201 = vshrl.u32 %v200, 7
    %v202 = vsub.s32 1, %v201
    %v203 = vrot.slane %v194, %v202
    %v206 = vsub.f32 %v172, %v199
    %v207 = vsub.f32 %v175, %v203
    %v208 = vmul.f32 %v206, 1.442695
    %v209 = vpow.pop %v208
    %v210 = vmul.f32 %v207, 1.442695
    %v211 = vpow.pop %v210
    %214 = vset.pattern.permute.xlu0 0
    %215 = vperm.xlu0 %214, %v209
    %v216 = vpop.permute.xlu0 %215
    %217 = vset.pattern.permute.xlu0 0
    %218 = vperm.xlu0 %217, %v211
    %v219 = vpop.permute.xlu0 %218
    %v220 = vlaneseq
    %v221 = vshrl.u32 %v220, 7
    %v222 = vsub.s32 %v179, %v221
    %v223 = vrot.slane %v216, %v222
    %v224 = vlaneseq
    %v225 = vshrl.u32 %v224, 7
    %v226 = vsub.s32 %v179, %v225
    %v227 = vrot.slane %v219, %v226
    %v228 = vsel %vm188, %v227, %v223
    %v230 = vsel %vm191, %v228, 0.0
    %231 = vadd.xlane.f32.xlu0 %v230
    %v232 = vpop.xlane.xlu0 %231
    %v234 = vlaneseq
    %v235 = vshrl.u32 %v234, 7
    %v236 = vsub.s32 0, %v235
    %v237 = vrot.slane %v232, %v236
    %v238 = vlaneseq
    %v239 = vshrl.u32 %v238, 7
    %v240 = vsub.s32 1, %v239
    %v241 = vrot.slane %v232, %v240
    %v244 = vrcp.pop %v237
    %v245 = vmul.f32 %v209, %v244
    %v246 = vrcp.pop %v241
    %v247 = vmul.f32 %v211, %v246
    %249 = vset.pattern.permute.xlu0 0
    %250 = vperm.xlu0 %249, %v245
    %v251 = vpop.permute.xlu0 %250
    %254 = vset.pattern.permute.xlu0 0
    %255 = vperm.xlu0 %254, %v247
    %v256 = vpop.permute.xlu0 %255
    %v258 = vmul.f32 %v251, %v54
    %v259 = vmul.f32 %v256, %v55
    %v260 = vsel %vm61, %v258, 0.0
    %v261 = vrot.slane %v260, 4
    %v262 = vadd.f32 %v260, %v261
    %v263 = vrot.slane %v262, 2
    %v264 = vadd.f32 %v262, %v263
    %v265 = vrot.slane %v264, 1
    %v266 = vadd.f32 %v264, %v265
    %v267 = vsel %vm61, %v259, 0.0
    %v268 = vrot.slane %v267, 4
    %v269 = vadd.f32 %v267, %v268
    %v270 = vrot.slane %v269, 2
    %v271 = vadd.f32 %v269, %v270
    %v272 = vrot.slane %v271, 1
    %v273 = vadd.f32 %v271, %v272
    %v276 = vsel %vm188, %v273, %v266
    %v277 = vsel %vm61, %v276, 0
    %279 = vmatprep.subr.mxu0 0.0
    %280 = vmatpush1.msra.mxu0 0.0
    %281 = vmatprep.subr.mxu0 0.0
    %282 = vmatpush1.msra.mxu0 0.0
    %283 = vmatprep.subr.mxu0 0.0
    %284 = vmatpush1.msra.mxu0 0.0
    %285 = vmatprep.subr.mxu0 0.0
    %286 = vmatpush1.msra.mxu0 0.0
    %287 = vmatprep.subr.mxu0 0.0
    %288 = vmatpush1.msra.mxu0 0.0
    %289 = vmatprep.subr.mxu0 0.0
    %290 = vmatpush1.msra.mxu0 0.0
    %291 = vmatprep.subr.mxu0 0.0
    %292 = vmatpush1.msra.mxu0 0.0
    %293 = vmatprep.subr.mxu0 0.0
    %294 = vmatpush1.msra.mxu0 0.0
    %295 = vmatprep.subr.mxu0 0.0
    %296 = vmatpush1.msra.mxu0 0.0
    %297 = vmatprep.subr.mxu0 0.0
    %298 = vmatpush1.msra.mxu0 0.0
    %299 = vmatprep.subr.mxu0 0.0
    %300 = vmatpush1.msra.mxu0 0.0
    %301 = vmatprep.subr.mxu0 0.0
    %302 = vmatpush1.msra.mxu0 0.0
    %303 = vmatprep.subr.mxu0 0.0
    %304 = vmatpush1.msra.mxu0 %v59
    %305 = vmatprep.subr.mxu0 0.0
    %306 = vmatpush1.msra.mxu0 %v58
    %307 = vmatprep.subr.mxu0 0.0
    %308 = vmatpush1.msra.mxu0 %v57
    %309 = vmatprep.subr.mxu0 0.0
    %310 = vmatpush1.msra.mxu0 %v56
    %311 = vmatprep.subr.mxu0 0.0
    %312 = vmatpush2.msra.mxu0 0.0
    %313 = vmatprep.subr.mxu0 0.0
    %314 = vmatpush2.msra.mxu0 0.0
    %315 = vmatprep.subr.mxu0 0.0
    %316 = vmatpush2.msra.mxu0 0.0
    %317 = vmatprep.subr.mxu0 0.0
    %318 = vmatpush2.msra.mxu0 0.0
    %319 = vmatprep.subr.mxu0 0.0
    %320 = vmatpush2.msra.mxu0 0.0
    %321 = vmatprep.subr.mxu0 0.0
    %322 = vmatpush2.msra.mxu0 0.0
    %323 = vmatprep.subr.mxu0 0.0
    %324 = vmatpush2.msra.mxu0 0.0
    %325 = vmatprep.subr.mxu0 0.0
    %326 = vmatpush2.msra.mxu0 0.0
    %327 = vmatprep.subr.mxu0 0.0
    %328 = vmatpush2.msra.mxu0 0.0
    %329 = vmatprep.subr.mxu0 0.0
    %330 = vmatpush2.msra.mxu0 0.0
    %331 = vmatprep.subr.mxu0 0.0
    %332 = vmatpush2.msra.mxu0 0.0
    %333 = vmatprep.subr.mxu0 0.0
    %334 = vmatpush2.msra.mxu0 0.0
    %335 = vmatprep.subr.mxu0 0.0
    %336 = vmatpush2.msra.mxu0 0.0
    %337 = vmatprep.subr.mxu0 0.0
    %338 = vmatpush2.msra.mxu0 0.0
    %339 = vmatprep.subr.mxu0 0.0
    %340 = vmatpush2.msra.mxu0 0.0
    %341 = vmatprep.subr.mxu0 0.0
    %342 = vmatpush2.msra.mxu0 0.0
    %343 = vmatprep.mubr.f32.mxu0 0.0
    %344 = vmatmul.mubr.f32.gmra.mxu0 %v277
    %v345 = vpop.f32.mrf.mxu0
    %v346 = vadd.f32 0.0, %v345
    %v347 = vpop.f32.mrf.mxu0
    %348 = vdwg.mxu0
    %v351 = vunpack.c.l.s4 1966171168
    %v352 = vunpack.c.0.s8 %v351
    %v353 = vlaneseq
    %v354 = vshrl.u32 %v353, 7
    %v355 = vsub.s32 %v352, %v354
    %v356 = vrot.slane %v346, %v355
    %v357 = vcombine.high %v356, %v356
    %v359 = vunpack.c.l.s4 1966171168
    %v360 = vunpack.c.0.s8 %v359
    %v361 = vlaneseq
    %v362 = vshrl.u32 %v361, 7
    %v363 = vsub.s32 %v360, %v362
    %v364 = vrot.slane %v356, %v363
    %v366 = vunpack.c.l.s4 1966171168
    %v367 = vunpack.c.0.s8 %v366
    %v368 = vlaneseq
    %v369 = vshrl.u32 %v368, 7
    %v370 = vsub.s32 %v367, %v369
    %v371 = vrot.slane %v357, %v370
    %v372 = vlaneseq
    %v373 = vshrl.u32 %v372, 7
    %v374 = vsub.s32 0, %v373
    %v375 = vrot.slane %v364, %v374
    %v376 = vlaneseq
    %v377 = vshrl.u32 %v376, 7
    %v378 = vsub.s32 0, %v377
    %v379 = vrot.slane %v371, %v378
    %v382 = vmul.f32 %v375, %v54
    %v383 = vmul.f32 %v379, %v55
    %v384 = vsel %vm61, %v382, 0.0
    %385 = vadd.xlane.f32.xlu0 %v384
    %v386 = vpop.xlane.xlu0 %385
    %v387 = vsel %vm61, %v383, 0.0
    %388 = vadd.xlane.f32.xlu0 %v387
    %v389 = vpop.xlane.xlu0 %388
    %v392 = vlaneseq
    %v393 = vshrl.u32 %v392, 7
    %v394 = vsub.s32 %v179, %v393
    %v395 = vrot.slane %v386, %v394
    %v396 = vlaneseq
    %v397 = vshrl.u32 %v396, 7
    %v398 = vsub.s32 %v179, %v397
    %v399 = vrot.slane %v389, %v398
    %v400 = vsel %vm188, %v399, %v395
    %v402 = vsel %vm191, %v400, -inf
    %403 = vmax.xlane.f32.xlu0 %v402
    %v404 = vpop.xlane.xlu0 %403
    %v406 = vlaneseq
    %v407 = vshrl.u32 %v406, 7
    %v408 = vsub.s32 0, %v407
    %v409 = vrot.slane %v404, %v408
    %v410 = vlaneseq
    %v411 = vshrl.u32 %v410, 7
    %v412 = vsub.s32 1, %v411
    %v413 = vrot.slane %v404, %v412
    %v416 = vsub.f32 %v386, %v409
    %v417 = vsub.f32 %v389, %v413
    %v418 = vmul.f32 %v416, 1.442695
    %v419 = vpow.pop %v418
    %v420 = vmul.f32 %v417, 1.442695
    %v421 = vpow.pop %v420
    %424 = vset.pattern.permute.xlu0 0
    %425 = vperm.xlu0 %424, %v419
    %v426 = vpop.permute.xlu0 %425
    %427 = vset.pattern.permute.xlu0 0
    %428 = vperm.xlu0 %427, %v421
    %v429 = vpop.permute.xlu0 %428
    %v430 = vlaneseq
    %v431 = vshrl.u32 %v430, 7
    %v432 = vsub.s32 %v179, %v431
    %v433 = vrot.slane %v426, %v432
    %v434 = vlaneseq
    %v435 = vshrl.u32 %v434, 7
    %v436 = vsub.s32 %v179, %v435
    %v437 = vrot.slane %v429, %v436
    %v438 = vsel %vm188, %v437, %v433
    %v440 = vsel %vm191, %v438, 0.0
    %441 = vadd.xlane.f32.xlu0 %v440
    %v442 = vpop.xlane.xlu0 %441
    %v444 = vlaneseq
    %v445 = vshrl.u32 %v444, 7
    %v446 = vsub.s32 0, %v445
    %v447 = vrot.slane %v442, %v446
    %v448 = vlaneseq
    %v449 = vshrl.u32 %v448, 7
    %v450 = vsub.s32 1, %v449
    %v451 = vrot.slane %v442, %v450
    %v454 = vrcp.pop %v447
    %v455 = vmul.f32 %v419, %v454
    %v456 = vrcp.pop %v451
    %v457 = vmul.f32 %v421, %v456
    %459 = vset.pattern.permute.xlu0 0
    %460 = vperm.xlu0 %459, %v455
    %v461 = vpop.permute.xlu0 %460
    %464 = vset.pattern.permute.xlu0 0
    %465 = vperm.xlu0 %464, %v457
    %v466 = vpop.permute.xlu0 %465
    %v468 = vmul.f32 %v461, %v54
    %v469 = vmul.f32 %v466, %v55
    %v470 = vsel %vm61, %v468, 0.0
    %v471 = vrot.slane %v470, 4
    %v472 = vadd.f32 %v470, %v471
    %v473 = vrot.slane %v472, 2
    %v474 = vadd.f32 %v472, %v473
    %v475 = vrot.slane %v474, 1
    %v476 = vadd.f32 %v474, %v475
    %v477 = vsel %vm61, %v469, 0.0
    %v478 = vrot.slane %v477, 4
    %v479 = vadd.f32 %v477, %v478
    %v480 = vrot.slane %v479, 2
    %v481 = vadd.f32 %v479, %v480
    %v482 = vrot.slane %v481, 1
    %v483 = vadd.f32 %v481, %v482
    %v486 = vsel %vm188, %v483, %v476
    %vm488 = vcmask 254976
    %489 = vst.msk [vmem:[#allocation8] sm:$0x3] %vm488, %v486
    // Predicated region
    $region26: #{tpu_custom_call.1} parent=1 // pred_check
      _
    $region27: #{tpu_custom_call.1} parent=1 // pred_check_branch
      %491 = sbr.rel (0) target = $region29
    $region28: #{tpu_custom_call.1} parent=1 // pred_region
      %s493 = ssub.s32 32, 32
      %494 = vsyncadd [#allocation4], %s493
      %s496 = sshll.u32 [#allocation8], 4
      %s497 = int_to_ptr.vmem [resolvable:$true] %s496
      %499 = dma.vmem_to_hbm [thread:$0]  %s497, 32, %s3, [#allocation4]
    $region29: #{tpu_custom_call.1} parent=1 // pred_fallthru
      _
    // Predicated region
    $region30: #{tpu_custom_call.1} parent=1 // pred_check
      _
    $region31: #{tpu_custom_call.1} parent=1 // pred_check_branch
      %501 = sbr.rel (0) target = $region33
    $region32: #{tpu_custom_call.1} parent=1 // pred_region
      %502 = dma.done [#allocation4], 32
    $region33: #{tpu_custom_call.1} parent=1 // pred_fallthru
      _
    %503 = vsyncpa [#allocation3], 1
    %504 = vsyncpa [#allocation6], 1
    %505 = vsyncpa [#allocation4], 1

</llo_original>
